<compile_context>
chip_gen: v5e
topology: v5e:2x2
jax: 0.10.0
libtpu: 0.0.40
codegen_flags: <defaults>
</compile_context>

<pallas_src>
import jax
import jax.numpy as jnp
from jax.experimental import pallas as pl
from jax.experimental.pallas import tpu as pltpu


_COLS = 1024        # lane-dense slab width: 8 * 128, (8,128)-aligned
_TILE_R = 256       # (256, 1024) f32 tile = 1 MiB; 4 MiB with double buffering


def _copy_kernel(x_ref, o_ref):
    # Identity copy of the current tile (mem-bound; DMA does the real work).
    o_ref[...] = x_ref[...]


def _resolve_view_size(size, total_elems):
    """Replicate torch.Tensor.view size resolution (supports a single -1)."""
    size = tuple(int(s) for s in size)
    if size.count(-1) > 1:
        raise ValueError("only one dimension can be inferred (-1)")
    known = 1
    for s in size:
        if s != -1:
            known *= s
    if -1 in size:
        if known == 0 or total_elems % known != 0:
            raise ValueError(f"shape {size} is invalid for input of size {total_elems}")
        inferred = total_elems // known
        size = tuple(inferred if s == -1 else s for s in size)
    else:
        if known != total_elems:
            raise ValueError(f"shape {size} is invalid for input of size {total_elems}")
    return size


def pallas_view(x, size):
    """Equivalent of torch View(size).forward(x) = x.view(size)."""
    out_shape = _resolve_view_size(size, x.size)
    total = x.size

    if total == 0:
        # Degenerate empty tensor: pure metadata, nothing to copy.
        return x.reshape(out_shape)

    # --- glue: present the data as a lane-dense (rows, 1024) slab ------------
    flat = x.reshape(-1)
    padded_total = pl.cdiv(total, _COLS) * _COLS
    pad = padded_total - total
    if pad:
        flat = jnp.pad(flat, (0, pad))
    rows = padded_total // _COLS
    flat2d = flat.reshape(rows, _COLS)

    # Tile rows: full extent for small inputs (block == full dim is always
    # legal), otherwise 256-row (1 MiB f32) tiles pipelined over the grid.
    tile_r = rows if rows < _TILE_R else _TILE_R
    grid = (pl.cdiv(rows, tile_r),)

    copied = pl.pallas_call(
        _copy_kernel,
        out_shape=jax.ShapeDtypeStruct((rows, _COLS), x.dtype),
        grid=grid,
        in_specs=[pl.BlockSpec((tile_r, _COLS), lambda i: (i, 0))],
        out_specs=pl.BlockSpec((tile_r, _COLS), lambda i: (i, 0)),
        # .view is metadata-only: let the output alias the input buffer so the
        # copy can happen in place (XLA drops the extra HBM allocation when the
        # input is donatable / an intermediate).
        input_output_aliases={0: 0},
        compiler_params=pltpu.CompilerParams(
            # Independent tiles -> shard the grid across both TCs on v7x
            # (neutral on single-TC v5e/v6e).
            dimension_semantics=("parallel",),
        ),
    )(flat2d)

    # --- glue: drop padding and apply the metadata-only reshape --------------
    flat_out = copied.reshape(-1)
    if pad:
        flat_out = flat_out[:total]
    return flat_out.reshape(out_shape)


if __name__ == "__main__":
    key = jax.random.PRNGKey(0)
    # Typical autoencoder usage: flatten conv feature map (N, C, H, W) -> (N, C*H*W)
    N, C, H, W = 2, 4, 16, 16
    x = jax.random.normal(key, (N, C, H, W), dtype=jnp.float32)

    view_size = (-1, C * H * W)  # View((-1, 1024))
    view_fn = jax.jit(pallas_view, static_argnums=1)

    out = view_fn(x, view_size)
    out = jax.block_until_ready(out)

    # Correctness check against plain JAX reshape (== torch .view on contiguous input)
    ref = x.reshape(N, C * H * W)
    assert out.shape == (N, C * H * W), out.shape
    assert out.dtype == x.dtype
    assert bool(jnp.all(out == ref))

    print("KERNEL_OK")
</pallas_src>

<mosaic_0001>
module attributes {stable_mosaic.version = 11 : i64} {
  func.func @_copy_kernel(%arg0: i32, %arg1: memref<2x1024xf32, #tpu.memory_space<vmem>>, %arg2: memref<2x1024xf32, #tpu.memory_space<vmem>>) attributes {dimension_semantics = [#tpu.dimension_semantics<parallel>], iteration_bounds = array<i64: 1>, scalar_prefetch = 0 : i64, scratch_operands = 0 : i64, tpu.core_type = #tpu.core_type<tc>, window_params = [{transform_indices = @transform_0, window_bounds = array<i64: 2, 1024>}, {transform_indices = @transform_1, window_bounds = array<i64: 2, 1024>}]} {
    %c0 = arith.constant 0 : index
    %c0_0 = arith.constant 0 : index
    %0 = vector.load %arg1[%c0, %c0_0] : memref<2x1024xf32, #tpu.memory_space<vmem>>, vector<2x1024xf32>
    %c0_1 = arith.constant 0 : index
    %c0_2 = arith.constant 0 : index
    %1 = vector.load %arg2[%c0_1, %c0_2] : memref<2x1024xf32, #tpu.memory_space<vmem>>, vector<2x1024xf32>
    tpu.vector_store %arg2[%c0_1, %c0_2], %0 {strides = array<i32>} : memref<2x1024xf32, #tpu.memory_space<vmem>>, vector<2x1024xf32>,
    return
  }
  func.func @transform_0(%arg0: i32) -> (i32, i32) {
    %c0_i32 = arith.constant 0 : i32
    %c0_i32_0 = arith.constant 0 : i32
    return %arg0, %c0_i32 : i32, i32
  }
  func.func @transform_1(%arg0: i32) -> (i32, i32) {
    %c0_i32 = arith.constant 0 : i32
    %c0_i32_0 = arith.constant 0 : i32
    return %arg0, %c0_i32 : i32, i32
  }
}

</mosaic_0001>

<llo_original>
// kernel: pallas_view.1
$region0: #{pallas_view.1}
  #allocation0 [shape = 'u32[]', space=smem, size = 0x4, offset = 0x4, fixed_abs, tag = 'smem constant byte address 0x4 - core index']
  #allocation1 [shape = 'u32[72,128]{1,0:T(1,128)}', space=vmem, size = 0x9000, scoped, tag = 'internal scratch']
  %s0 = inlined_call_operand.hbm [shape: f32[2,1024], index: 0, kind: input, shape index: {}, may-alias: {0,1}]
  %s1 = inlined_call_operand.hbm [shape: f32[2,1024], index: 1, kind: output, shape index: {}, may-alias: {0,1}]
  %s2 = sld [smem:[#allocation0]]
  $region18: #{pallas_view.1} parent=0
    _
  %s4 = ssub.s32 1, %s2
  %s5 = scalar_select 0, %s4, %s2
  $region1: #{pallas_view.1} parent=0
    #allocation2 [shape = 'u8[8192]{0}', space=vmem, size = 0x2000, scoped, tag = 'input window, operand 0, single buffered']
    #allocation3 [shape = 's32[1]{0}', space=sflag, size = 0x4, scoped, tag = 'scoped memory for pallas_view.1']
    #allocation4 [shape = 's32[1]{0}', space=sflag, size = 0x4, scoped, tag = 'scoped memory for pallas_view.1']
    #allocation5 [shape = 'u8[8192]{0}', space=vmem, size = 0x2000, scoped, tag = 'output window, operand 0, single buffered']
    %6 = vsyncpa [#allocation3], 0
    %7 = vsyncpa [#allocation4], 0
    // Predicated region
    $region2: #{pallas_view.1} parent=1 // pred_check
      _
    $region3: #{pallas_view.1} parent=1 // pred_check_branch
      %9 = sbr.rel (0) target = $region5
    $region4: #{pallas_view.1} parent=1 // pred_region
      %11 = vsyncadd [#allocation3], 0
      %s13 = sshll.u32 %s0, 4
      %s14 = int_to_ptr.hbm [resolvable:$true] %s13
      %s15 = sshll.u32 [#allocation2], 4
      %s16 = int_to_ptr.vmem [resolvable:$true] %s15
      %18 = dma.hbm_to_vmem [thread:$0]  %s14, 256, %s16, [#allocation3]
    $region5: #{pallas_view.1} parent=1 // pred_fallthru
      _
    // Predicated region
    $region6: #{pallas_view.1} parent=1 // pred_check
      _
    $region7: #{pallas_view.1} parent=1 // pred_check_branch
      %20 = sbr.rel (0) target = $region9
    $region8: #{pallas_view.1} parent=1 // pred_region
      %22 = dma.done [#allocation3], 256
    $region9: #{pallas_view.1} parent=1 // pred_fallthru
      _
    %v23 = vld [vmem:[#allocation2] sm:$0xff]
    %v24 = vld [vmem:[#allocation2 + $0x8] sm:$0xff]
    %25 = vst [vmem:[#allocation5] sm:$0xff] %v23
    %26 = vst [vmem:[#allocation5 + $0x8] sm:$0xff] %v24
    // Predicated region
    $region10: #{pallas_view.1} parent=1 // pred_check
      _
    $region11: #{pallas_view.1} parent=1 // pred_check_branch
      %28 = sbr.rel (0) target = $region13
    $region12: #{pallas_view.1} parent=1 // pred_region
      %30 = vsyncadd [#allocation4], 0
      %s32 = sshll.u32 [#allocation5], 4
      %s33 = int_to_ptr.vmem [resolvable:$true] %s32
      %s34 = sshll.u32 %s1, 4
      %s35 = int_to_ptr.hbm [resolvable:$true] %s34
      %37 = dma.vmem_to_hbm [thread:$0]  %s33, 256, %s35, [#allocation4]
    $region13: #{pallas_view.1} parent=1 // pred_fallthru
      _
    // Predicated region
    $region14: #{pallas_view.1} parent=1 // pred_check
      _
    $region15: #{pallas_view.1} parent=1 // pred_check_branch
      %39 = sbr.rel (0) target = $region17
    $region16: #{pallas_view.1} parent=1 // pred_region
      %41 = dma.done [#allocation4], 256
    $region17: #{pallas_view.1} parent=1 // pred_fallthru
      _
    %42 = vsyncpa [#allocation3], 1
    %43 = vsyncpa [#allocation4], 1

</llo_original>
